<compile_context>
chip_gen: v7x
topology: tpu7x:2x2x1
jax: 0.10.0
libtpu: 0.0.40
codegen_flags: <defaults>
</compile_context>

<pallas_src>
import functools

import jax
import jax.numpy as jnp
from jax.experimental import pallas as pl
from jax.experimental.pallas import tpu as pltpu

EPS = 1e-5


def small_block_kernel(x_ref, w1_ref, w2_ref, g1_ref, be1_ref, g2_ref, be2_ref,
                       csum_ref, out_ref, hal_ref, *, C):
    # x_ref     : (N, H, W*C)   unpadded input, channel fastest along lanes
    # w{1,2}_ref: (3, W*C, W*C) banded conv weights, one band per vertical tap
    # g*/be*    : (1, W*C)      BN affine params, pre-replicated per lane
    # csum_ref  : (W*C, W*C)    channel-group-sum matrix (lane i -> lanes with
    #                           the same channel i % C) for BN batch stats
    # out_ref   : (N, H, W*C)
    # hal_ref   : (N, H+2, W*C) VMEM scratch with a 1-row vertical halo
    N, H, WC = x_ref.shape
    W = WC // C
    M = N * H
    inv_cnt = 1.0 / float(M * W)          # 1 / (N*H*W) samples per channel
    csum = csum_ref[...]

    # Load x once; reused for halo staging and the residual add.
    xv = x_ref[...]                                       # (N, H, WC)

    # Stage the input into the halo scratch; zero only the two halo rows
    # (they remain zero for conv2 as well).
    zrow = jnp.zeros((N, 1, WC), jnp.float32)
    hal_ref[:, 0:1, :] = zrow
    hal_ref[:, H + 1:H + 2, :] = zrow
    hal_ref[:, 1:H + 1, :] = xv

    def conv3x3(w_ref):
        # One lane-dense MXU matmul per vertical tap; horizontal taps and the
        # width zero-padding are already folded into the banded weights.
        acc = jnp.dot(hal_ref[:, 0:H, :].reshape(M, WC), w_ref[0],
                      preferred_element_type=jnp.float32)
        for dy in (1, 2):
            lhs = hal_ref[:, dy:dy + H, :].reshape(M, WC)
            acc = acc + jnp.dot(lhs, w_ref[dy],
                                preferred_element_type=jnp.float32)
        return acc                                        # (M, WC) f32

    def bn_scale_shift(a, g_ref, be_ref):
        # Training-mode BN with one-pass batch stats (biased variance).
        # One lane-dense matmul reduces sum / sum-of-squares to per-channel
        # values already replicated across all W lane positions.
        rs = jnp.sum(a, axis=0, keepdims=True)            # (1, WC)
        rss = jnp.sum(a * a, axis=0, keepdims=True)       # (1, WC)
        stats = jnp.concatenate([rs, rss], axis=0)        # (2, WC)
        proj = jnp.dot(stats, csum,
                       preferred_element_type=jnp.float32) * inv_cnt
        mean = proj[0:1, :]                               # (1, WC)
        ex2 = proj[1:2, :]                                # (1, WC)
        var = ex2 - mean * mean
        scale = g_ref[...] * jax.lax.rsqrt(var + EPS)     # (1, WC)
        shift = be_ref[...] - mean * scale                # (1, WC)
        return scale, shift

    # conv1 + BN1 + ReLU.  Conv bias omitted: it cancels under batch-stat BN.
    a1 = conv3x3(w1_ref)
    s1, t1 = bn_scale_shift(a1, g1_ref, be1_ref)
    y = jnp.maximum(a1 * s1 + t1, 0.0)

    # Stage y into the same scratch (halo rows are still zero), then conv2+BN2.
    hal_ref[:, 1:H + 1, :] = y.reshape(N, H, WC)
    a2 = conv3x3(w2_ref)
    s2, t2 = bn_scale_shift(a2, g2_ref, be2_ref)

    # Residual (from the in-vreg input) + final ReLU, lane-dense store.
    res = xv.reshape(M, WC)
    out_ref[...] = jnp.maximum(a2 * s2 + t2 + res, 0.0).reshape(N, H, WC)


def _banded_conv_weights(w_hwio, W):
    """(3, 3, C, C) HWIO -> (3, W*C, W*C).

    Folds the 3 horizontal taps and the width zero-padding of a stride-1
    'same' conv into banded matrices (one per vertical tap) acting on rows
    flattened as (w, c) -> w*C + c.
    """
    C = w_hwio.shape[2]
    wi = jnp.arange(W)[:, None]           # input column
    wo = jnp.arange(W)[None, :]           # output column
    kx = wi - wo + 1                      # horizontal tap index
    valid = ((kx >= 0) & (kx <= 2)).astype(w_hwio.dtype)
    taps = w_hwio[:, jnp.clip(kx, 0, 2)] * valid[None, :, :, None, None]  # (3,W,W,C,C)
    # (ky, wi, wo, ci, co) -> (ky, wi, ci, wo, co) -> (3, W*C, W*C)
    return taps.transpose(0, 1, 3, 2, 4).reshape(3, W * C, W * C)


def small_block_forward(x_nhwc, params):
    """x_nhwc: (N, H, W, C) float32. Returns (N, H, W, C) float32."""
    N, H, W, C = x_nhwc.shape
    WC = W * C
    x = x_nhwc.reshape(N, H, WC)          # free reshape: lane-dense last dim

    w1b = _banded_conv_weights(params["w1"], W)
    w2b = _banded_conv_weights(params["w2"], W)
    # Pre-replicate BN affine params per lane (lane = w*C + c): tiny, done once.
    g1 = jnp.tile(params["g1"].reshape(1, C), (1, W))
    be1 = jnp.tile(params["be1"].reshape(1, C), (1, W))
    g2 = jnp.tile(params["g2"].reshape(1, C), (1, W))
    be2 = jnp.tile(params["be2"].reshape(1, C), (1, W))
    # Channel-group-sum matrix: csum[i, j] = (i % C == j % C), for BN stats
    # reduced per channel and replicated back to all lanes in one matmul.
    lanes = jnp.arange(WC)
    csum = (lanes[:, None] % C == lanes[None, :] % C).astype(jnp.float32)

    vmem = pl.BlockSpec(memory_space=pltpu.MemorySpace.VMEM)
    out = pl.pallas_call(
        functools.partial(small_block_kernel, C=C),
        out_shape=jax.ShapeDtypeStruct((N, H, WC), jnp.float32),
        in_specs=[vmem] * 8,
        out_specs=vmem,
        scratch_shapes=[pltpu.VMEM((N, H + 2, WC), jnp.float32)],
    )(x, w1b, w2b, g1, be1, g2, be2, csum)
    return out.reshape(N, H, W, C)


# ---------------- pure-JAX reference (for sanity check only) ----------------
def _conv3x3_ref(x, w, b):
    return jax.lax.conv_general_dilated(
        x, w, window_strides=(1, 1), padding=((1, 1), (1, 1)),
        dimension_numbers=("NHWC", "HWIO", "NHWC"),
        precision=jax.lax.Precision.HIGHEST) + b.reshape(1, 1, 1, -1)


def _bn_train_ref(x, g, be):
    m = jnp.mean(x, axis=(0, 1, 2), keepdims=True)
    v = jnp.mean((x - m) ** 2, axis=(0, 1, 2), keepdims=True)
    return (x - m) * jax.lax.rsqrt(v + EPS) * g.reshape(1, 1, 1, -1) + be.reshape(1, 1, 1, -1)


def small_block_reference(x_nhwc, p):
    y = jnp.maximum(_bn_train_ref(_conv3x3_ref(x_nhwc, p["w1"], p["b1"]), p["g1"], p["be1"]), 0.0)
    z = _bn_train_ref(_conv3x3_ref(y, p["w2"], p["b2"]), p["g2"], p["be2"])
    return jnp.maximum(z + x_nhwc, 0.0)


if __name__ == "__main__":
    N, C, H, W = 2, 8, 16, 16  # in_channels == out_channels == 8 (stride=1 path); W*C = 128

    key = jax.random.PRNGKey(0)
    kx, kw1, kb1, kw2, kb2 = jax.random.split(key, 5)

    params = {
        "w1": jax.random.normal(kw1, (3, 3, C, C), jnp.float32) / jnp.sqrt(9.0 * C),
        "b1": jax.random.normal(kb1, (C,), jnp.float32) * 0.1,
        "g1": jnp.ones((C,), jnp.float32),
        "be1": jnp.zeros((C,), jnp.float32),
        "w2": jax.random.normal(kw2, (3, 3, C, C), jnp.float32) / jnp.sqrt(9.0 * C),
        "b2": jax.random.normal(kb2, (C,), jnp.float32) * 0.1,
        "g2": jnp.ones((C,), jnp.float32),
        "be2": jnp.zeros((C,), jnp.float32),
    }

    # PyTorch-style NCHW input, converted to NHWC for the kernel.
    x_nchw = jax.random.normal(kx, (N, C, H, W), jnp.float32)
    x_nhwc = jnp.transpose(x_nchw, (0, 2, 3, 1))

    fwd = jax.jit(small_block_forward)
    out_nhwc = jax.block_until_ready(fwd(x_nhwc, params))
    out_nchw = jnp.transpose(out_nhwc, (0, 3, 1, 2))  # back to PyTorch layout

    ref = small_block_reference(x_nhwc, params)
    err = float(jnp.max(jnp.abs(out_nhwc - ref)))
    assert out_nchw.shape == (N, C, H, W)
    assert err < 2e-3, f"max abs error too large: {err}"

    print("KERNEL_OK")
</pallas_src>

<mosaic_0001>
module attributes {stable_mosaic.version = 11 : i64} {
  func.func @small_block_kernel(%arg0: memref<2x16x128xf32, #tpu.memory_space<vmem>>, %arg1: memref<3x128x128xf32, #tpu.memory_space<vmem>>, %arg2: memref<3x128x128xf32, #tpu.memory_space<vmem>>, %arg3: memref<1x128xf32, #tpu.memory_space<vmem>>, %arg4: memref<1x128xf32, #tpu.memory_space<vmem>>, %arg5: memref<1x128xf32, #tpu.memory_space<vmem>>, %arg6: memref<1x128xf32, #tpu.memory_space<vmem>>, %arg7: memref<128x128xf32, #tpu.memory_space<vmem>>, %arg8: memref<2x16x128xf32, #tpu.memory_space<vmem>>, %arg9: memref<2x18x128xf32, #tpu.memory_space<vmem>>) attributes {dimension_semantics = [], scalar_prefetch = 0 : i64, scratch_operands = 1 : i64, tpu.core_type = #tpu.core_type<tc>} {
    %c0 = arith.constant 0 : index
    %c0_0 = arith.constant 0 : index
    %0 = vector.load %arg7[%c0, %c0_0] : memref<128x128xf32, #tpu.memory_space<vmem>>, vector<128x128xf32>
    %c0_1 = arith.constant 0 : index
    %c0_2 = arith.constant 0 : index
    %c0_3 = arith.constant 0 : index
    %1 = vector.load %arg0[%c0_1, %c0_2, %c0_3] : memref<2x16x128xf32, #tpu.memory_space<vmem>>, vector<2x16x128xf32>
    %cst = arith.constant 0.000000e+00 : f32
    %2 = vector.broadcast %cst : f32 to vector<2x1x128xf32>
    %c0_4 = arith.constant 0 : index
    %c0_5 = arith.constant 0 : index
    %c0_6 = arith.constant 0 : index
    %3 = vector.load %arg9[%c0_4, %c0_5, %c0_6] : memref<2x18x128xf32, #tpu.memory_space<vmem>>, vector<2x1x128xf32>
    tpu.vector_store %arg9[%c0_4, %c0_5, %c0_6], %2 {strides = array<i32>} : memref<2x18x128xf32, #tpu.memory_space<vmem>>, vector<2x1x128xf32>,
    %c0_7 = arith.constant 0 : index
    %c17 = arith.constant 17 : index
    %c0_8 = arith.constant 0 : index
    %4 = vector.load %arg9[%c0_7, %c17, %c0_8] : memref<2x18x128xf32, #tpu.memory_space<vmem>>, vector<2x1x128xf32>
    tpu.vector_store %arg9[%c0_7, %c17, %c0_8], %2 {strides = array<i32>} : memref<2x18x128xf32, #tpu.memory_space<vmem>>, vector<2x1x128xf32>,
    %c0_9 = arith.constant 0 : index
    %c1 = arith.constant 1 : index
    %c0_10 = arith.constant 0 : index
    %5 = vector.load %arg9[%c0_9, %c1, %c0_10] : memref<2x18x128xf32, #tpu.memory_space<vmem>>, vector<2x16x128xf32>
    tpu.vector_store %arg9[%c0_9, %c1, %c0_10], %1 {strides = array<i32>} : memref<2x18x128xf32, #tpu.memory_space<vmem>>, vector<2x16x128xf32>,
    %c0_11 = arith.constant 0 : index
    %c0_12 = arith.constant 0 : index
    %c0_13 = arith.constant 0 : index
    %6 = vector.load %arg9[%c0_11, %c0_12, %c0_13] : memref<2x18x128xf32, #tpu.memory_space<vmem>>, vector<2x16x128xf32>
    %7 = vector.shape_cast %6 : vector<2x16x128xf32> to vector<32x128xf32>
    %c0_14 = arith.constant 0 : index
    %c0_15 = arith.constant 0 : index
    %c0_16 = arith.constant 0 : index
    %8 = vector.load %arg1[%c0_14, %c0_15, %c0_16] : memref<3x128x128xf32, #tpu.memory_space<vmem>>, vector<1x128x128xf32>
    %9 = vector.shape_cast %8 : vector<1x128x128xf32> to vector<128x128xf32>
    %cst_17 = arith.constant dense<0.000000e+00> : vector<32x128xf32>
    %10 = tpu.matmul %7, %9, %cst_17 {dimension_numbers = #tpu.dot_dimension_numbers<[1], [0], [0], [1], [0, 0, 1, 1], [], []>} : vector<32x128xf32>, vector<128x128xf32>, vector<32x128xf32> -> vector<32x128xf32>
    %c0_18 = arith.constant 0 : index
    %c1_19 = arith.constant 1 : index
    %c0_20 = arith.constant 0 : index
    %11 = vector.load %arg9[%c0_18, %c1_19, %c0_20] : memref<2x18x128xf32, #tpu.memory_space<vmem>>, vector<2x16x128xf32>
    %12 = vector.shape_cast %11 : vector<2x16x128xf32> to vector<32x128xf32>
    %c1_21 = arith.constant 1 : index
    %c0_22 = arith.constant 0 : index
    %c0_23 = arith.constant 0 : index
    %13 = vector.load %arg1[%c1_21, %c0_22, %c0_23] : memref<3x128x128xf32, #tpu.memory_space<vmem>>, vector<1x128x128xf32>
    %14 = vector.shape_cast %13 : vector<1x128x128xf32> to vector<128x128xf32>
    %cst_24 = arith.constant dense<0.000000e+00> : vector<32x128xf32>
    %15 = tpu.matmul %12, %14, %cst_24 {dimension_numbers = #tpu.dot_dimension_numbers<[1], [0], [0], [1], [0, 0, 1, 1], [], []>} : vector<32x128xf32>, vector<128x128xf32>, vector<32x128xf32> -> vector<32x128xf32>
    %16 = arith.addf %10, %15 : vector<32x128xf32>
    %c0_25 = arith.constant 0 : index
    %c2 = arith.constant 2 : index
    %c0_26 = arith.constant 0 : index
    %17 = vector.load %arg9[%c0_25, %c2, %c0_26] : memref<2x18x128xf32, #tpu.memory_space<vmem>>, vector<2x16x128xf32>
    %18 = vector.shape_cast %17 : vector<2x16x128xf32> to vector<32x128xf32>
    %c2_27 = arith.constant 2 : index
    %c0_28 = arith.constant 0 : index
    %c0_29 = arith.constant 0 : index
    %19 = vector.load %arg1[%c2_27, %c0_28, %c0_29] : memref<3x128x128xf32, #tpu.memory_space<vmem>>, vector<1x128x128xf32>
    %20 = vector.shape_cast %19 : vector<1x128x128xf32> to vector<128x128xf32>
    %cst_30 = arith.constant dense<0.000000e+00> : vector<32x128xf32>
    %21 = tpu.matmul %18, %20, %cst_30 {dimension_numbers = #tpu.dot_dimension_numbers<[1], [0], [0], [1], [0, 0, 1, 1], [], []>} : vector<32x128xf32>, vector<128x128xf32>, vector<32x128xf32> -> vector<32x128xf32>
    %22 = arith.addf %16, %21 : vector<32x128xf32>
    %cst_31 = arith.constant dense<0.000000e+00> : vector<128xf32>
    %23 = vector.multi_reduction <add>, %22, %cst_31 [0] : vector<32x128xf32> to vector<128xf32>
    %24 = vector.shape_cast %23 : vector<128xf32> to vector<1x128xf32>
    %25 = arith.mulf %22, %22 : vector<32x128xf32>
    %cst_32 = arith.constant dense<0.000000e+00> : vector<128xf32>
    %26 = vector.multi_reduction <add>, %25, %cst_32 [0] : vector<32x128xf32> to vector<128xf32>
    %27 = vector.shape_cast %26 : vector<128xf32> to vector<1x128xf32>
    %28 = tpu.concatenate %24, %27 in 0 : vector<1x128xf32>, vector<1x128xf32> -> vector<2x128xf32>
    %cst_33 = arith.constant dense<0.000000e+00> : vector<2x128xf32>
    %29 = tpu.matmul %28, %0, %cst_33 {dimension_numbers = #tpu.dot_dimension_numbers<[1], [0], [0], [1], [0, 0, 1, 1], [], []>} : vector<2x128xf32>, vector<128x128xf32>, vector<2x128xf32> -> vector<2x128xf32>
    %cst_34 = arith.constant 0.001953125 : f32
    %30 = vector.broadcast %cst_34 : f32 to vector<2x128xf32>
    %31 = arith.mulf %29, %30 : vector<2x128xf32>
    %32 = vector.extract_strided_slice %31 {offsets = [0, 0], sizes = [1, 128], strides = [1, 1]} : vector<2x128xf32> to vector<1x128xf32>
    %33 = vector.extract_strided_slice %31 {offsets = [1, 0], sizes = [1, 128], strides = [1, 1]} : vector<2x128xf32> to vector<1x128xf32>
    %34 = arith.mulf %32, %32 : vector<1x128xf32>
    %35 = arith.subf %33, %34 : vector<1x128xf32>
    %c0_35 = arith.constant 0 : index
    %c0_36 = arith.constant 0 : index
    %36 = vector.load %arg3[%c0_35, %c0_36] : memref<1x128xf32, #tpu.memory_space<vmem>>, vector<1x128xf32>
    %cst_37 = arith.constant 9.99999974E-6 : f32
    %37 = vector.broadcast %cst_37 : f32 to vector<1x128xf32>
    %38 = arith.addf %35, %37 : vector<1x128xf32>
    %39 = math.rsqrt %38 : vector<1x128xf32>
    %40 = arith.mulf %36, %39 : vector<1x128xf32>
    %c0_38 = arith.constant 0 : index
    %c0_39 = arith.constant 0 : index
    %41 = vector.load %arg4[%c0_38, %c0_39] : memref<1x128xf32, #tpu.memory_space<vmem>>, vector<1x128xf32>
    %42 = arith.mulf %32, %40 : vector<1x128xf32>
    %43 = arith.subf %41, %42 : vector<1x128xf32>
    %44 = vector.broadcast %40 : vector<1x128xf32> to vector<32x128xf32>
    %45 = arith.mulf %22, %44 : vector<32x128xf32>
    %46 = vector.broadcast %43 : vector<1x128xf32> to vector<32x128xf32>
    %47 = arith.addf %45, %46 : vector<32x128xf32>
    %cst_40 = arith.constant 0.000000e+00 : f32
    %48 = vector.broadcast %cst_40 : f32 to vector<32x128xf32>
    %49 = arith.maximumf %47, %48 : vector<32x128xf32>
    %50 = vector.shape_cast %49 : vector<32x128xf32> to vector<2x16x128xf32>
    %c0_41 = arith.constant 0 : index
    %c1_42 = arith.constant 1 : index
    %c0_43 = arith.constant 0 : index
    %51 = vector.load %arg9[%c0_41, %c1_42, %c0_43] : memref<2x18x128xf32, #tpu.memory_space<vmem>>, vector<2x16x128xf32>
    tpu.vector_store %arg9[%c0_41, %c1_42, %c0_43], %50 {strides = array<i32>} : memref<2x18x128xf32, #tpu.memory_space<vmem>>, vector<2x16x128xf32>,
    %c0_44 = arith.constant 0 : index
    %c0_45 = arith.constant 0 : index
    %c0_46 = arith.constant 0 : index
    %52 = vector.load %arg9[%c0_44, %c0_45, %c0_46] : memref<2x18x128xf32, #tpu.memory_space<vmem>>, vector<2x16x128xf32>
    %53 = vector.shape_cast %52 : vector<2x16x128xf32> to vector<32x128xf32>
    %c0_47 = arith.constant 0 : index
    %c0_48 = arith.constant 0 : index
    %c0_49 = arith.constant 0 : index
    %54 = vector.load %arg2[%c0_47, %c0_48, %c0_49] : memref<3x128x128xf32, #tpu.memory_space<vmem>>, vector<1x128x128xf32>
    %55 = vector.shape_cast %54 : vector<1x128x128xf32> to vector<128x128xf32>
    %cst_50 = arith.constant dense<0.000000e+00> : vector<32x128xf32>
    %56 = tpu.matmul %53, %55, %cst_50 {dimension_numbers = #tpu.dot_dimension_numbers<[1], [0], [0], [1], [0, 0, 1, 1], [], []>} : vector<32x128xf32>, vector<128x128xf32>, vector<32x128xf32> -> vector<32x128xf32>
    %c0_51 = arith.constant 0 : index
    %c1_52 = arith.constant 1 : index
    %c0_53 = arith.constant 0 : index
    %57 = vector.load %arg9[%c0_51, %c1_52, %c0_53] : memref<2x18x128xf32, #tpu.memory_space<vmem>>, vector<2x16x128xf32>
    %58 = vector.shape_cast %57 : vector<2x16x128xf32> to vector<32x128xf32>
    %c1_54 = arith.constant 1 : index
    %c0_55 = arith.constant 0 : index
    %c0_56 = arith.constant 0 : index
    %59 = vector.load %arg2[%c1_54, %c0_55, %c0_56] : memref<3x128x128xf32, #tpu.memory_space<vmem>>, vector<1x128x128xf32>
    %60 = vector.shape_cast %59 : vector<1x128x128xf32> to vector<128x128xf32>
    %cst_57 = arith.constant dense<0.000000e+00> : vector<32x128xf32>
    %61 = tpu.matmul %58, %60, %cst_57 {dimension_numbers = #tpu.dot_dimension_numbers<[1], [0], [0], [1], [0, 0, 1, 1], [], []>} : vector<32x128xf32>, vector<128x128xf32>, vector<32x128xf32> -> vector<32x128xf32>
    %62 = arith.addf %56, %61 : vector<32x128xf32>
    %c0_58 = arith.constant 0 : index
    %c2_59 = arith.constant 2 : index
    %c0_60 = arith.constant 0 : index
    %63 = vector.load %arg9[%c0_58, %c2_59, %c0_60] : memref<2x18x128xf32, #tpu.memory_space<vmem>>, vector<2x16x128xf32>
    %64 = vector.shape_cast %63 : vector<2x16x128xf32> to vector<32x128xf32>
    %c2_61 = arith.constant 2 : index
    %c0_62 = arith.constant 0 : index
    %c0_63 = arith.constant 0 : index
    %65 = vector.load %arg2[%c2_61, %c0_62, %c0_63] : memref<3x128x128xf32, #tpu.memory_space<vmem>>, vector<1x128x128xf32>
    %66 = vector.shape_cast %65 : vector<1x128x128xf32> to vector<128x128xf32>
    %cst_64 = arith.constant dense<0.000000e+00> : vector<32x128xf32>
    %67 = tpu.matmul %64, %66, %cst_64 {dimension_numbers = #tpu.dot_dimension_numbers<[1], [0], [0], [1], [0, 0, 1, 1], [], []>} : vector<32x128xf32>, vector<128x128xf32>, vector<32x128xf32> -> vector<32x128xf32>
    %68 = arith.addf %62, %67 : vector<32x128xf32>
    %cst_65 = arith.constant dense<0.000000e+00> : vector<128xf32>
    %69 = vector.multi_reduction <add>, %68, %cst_65 [0] : vector<32x128xf32> to vector<128xf32>
    %70 = vector.shape_cast %69 : vector<128xf32> to vector<1x128xf32>
    %71 = arith.mulf %68, %68 : vector<32x128xf32>
    %cst_66 = arith.constant dense<0.000000e+00> : vector<128xf32>
    %72 = vector.multi_reduction <add>, %71, %cst_66 [0] : vector<32x128xf32> to vector<128xf32>
    %73 = vector.shape_cast %72 : vector<128xf32> to vector<1x128xf32>
    %74 = tpu.concatenate %70, %73 in 0 : vector<1x128xf32>, vector<1x128xf32> -> vector<2x128xf32>
    %cst_67 = arith.constant dense<0.000000e+00> : vector<2x128xf32>
    %75 = tpu.matmul %74, %0, %cst_67 {dimension_numbers = #tpu.dot_dimension_numbers<[1], [0], [0], [1], [0, 0, 1, 1], [], []>} : vector<2x128xf32>, vector<128x128xf32>, vector<2x128xf32> -> vector<2x128xf32>
    %cst_68 = arith.constant 0.001953125 : f32
    %76 = vector.broadcast %cst_68 : f32 to vector<2x128xf32>
    %77 = arith.mulf %75, %76 : vector<2x128xf32>
    %78 = vector.extract_strided_slice %77 {offsets = [0, 0], sizes = [1, 128], strides = [1, 1]} : vector<2x128xf32> to vector<1x128xf32>
    %79 = vector.extract_strided_slice %77 {offsets = [1, 0], sizes = [1, 128], strides = [1, 1]} : vector<2x128xf32> to vector<1x128xf32>
    %80 = arith.mulf %78, %78 : vector<1x128xf32>
    %81 = arith.subf %79, %80 : vector<1x128xf32>
    %c0_69 = arith.constant 0 : index
    %c0_70 = arith.constant 0 : index
    %82 = vector.load %arg5[%c0_69, %c0_70] : memref<1x128xf32, #tpu.memory_space<vmem>>, vector<1x128xf32>
    %cst_71 = arith.constant 9.99999974E-6 : f32
    %83 = vector.broadcast %cst_71 : f32 to vector<1x128xf32>
    %84 = arith.addf %81, %83 : vector<1x128xf32>
    %85 = math.rsqrt %84 : vector<1x128xf32>
    %86 = arith.mulf %82, %85 : vector<1x128xf32>
    %c0_72 = arith.constant 0 : index
    %c0_73 = arith.constant 0 : index
    %87 = vector.load %arg6[%c0_72, %c0_73] : memref<1x128xf32, #tpu.memory_space<vmem>>, vector<1x128xf32>
    %88 = arith.mulf %78, %86 : vector<1x128xf32>
    %89 = arith.subf %87, %88 : vector<1x128xf32>
    %90 = vector.shape_cast %1 : vector<2x16x128xf32> to vector<32x128xf32>
    %91 = vector.broadcast %86 : vector<1x128xf32> to vector<32x128xf32>
    %92 = arith.mulf %68, %91 : vector<32x128xf32>
    %93 = vector.broadcast %89 : vector<1x128xf32> to vector<32x128xf32>
    %94 = arith.addf %92, %93 : vector<32x128xf32>
    %95 = arith.addf %94, %90 : vector<32x128xf32>
    %cst_74 = arith.constant 0.000000e+00 : f32
    %96 = vector.broadcast %cst_74 : f32 to vector<32x128xf32>
    %97 = arith.maximumf %95, %96 : vector<32x128xf32>
    %98 = vector.shape_cast %97 : vector<32x128xf32> to vector<2x16x128xf32>
    %c0_75 = arith.constant 0 : index
    %c0_76 = arith.constant 0 : index
    %c0_77 = arith.constant 0 : index
    %99 = vector.load %arg8[%c0_75, %c0_76, %c0_77] : memref<2x16x128xf32, #tpu.memory_space<vmem>>, vector<2x16x128xf32>
    tpu.vector_store %arg8[%c0_75, %c0_76, %c0_77], %98 {strides = array<i32>} : memref<2x16x128xf32, #tpu.memory_space<vmem>>, vector<2x16x128xf32>,
    return
  }
}

</mosaic_0001>

<llo_original>
// kernel: small_block_forward.1
$region0: #{small_block_forward.1}
  #allocation0 [shape = 'u32[]', space=smem, size = 0x4, offset = 0x4, fixed_abs, tag = 'smem constant byte address 0x4 - core index']
  #allocation1 [shape = 'u32[144,128]{1,0:T(1,128)}', space=vmem, size = 0x12000, scoped, tag = 'internal scratch']
  #allocation2 [shape = 'f32[2,18,128]{2,1,0:T(8,128)}', space=vmem, size = 0x6000, scoped, tag = 'scratch operand']
  %s0 = inlined_call_operand.vmem [shape: f32[2,16,128], index: 0, kind: input, shape index: {}]
  %s1 = inlined_call_operand.vmem [shape: f32[3,128,128], index: 1, kind: input, shape index: {}]
  %s2 = inlined_call_operand.vmem [shape: f32[3,128,128], index: 2, kind: input, shape index: {}]
  %s3 = inlined_call_operand.vmem [shape: f32[1,128], index: 3, kind: input, shape index: {}]
  %s4 = inlined_call_operand.vmem [shape: f32[1,128], index: 4, kind: input, shape index: {}]
  %s5 = inlined_call_operand.vmem [shape: f32[1,128], index: 5, kind: input, shape index: {}]
  %s6 = inlined_call_operand.vmem [shape: f32[1,128], index: 6, kind: input, shape index: {}]
  %s7 = inlined_call_operand.vmem [shape: f32[128,128], index: 7, kind: input, shape index: {}]
  %s8 = inlined_call_operand.vmem [shape: f32[2,16,128], index: 8, kind: output, shape index: {}]
  %s9 = sld [smem:[#allocation0]]
  $region42: #{small_block_forward.1} parent=0
    _
  %s11 = ssub.s32 1, %s9
  %s12 = scalar_select 0, %s11, %s9
  // Predicated region
  $region2: #{small_block_forward.1} parent=0 // pred_check
    _
  $region3: #{small_block_forward.1} parent=0 // pred_check_branch
    %14 = sbr.rel (0) target = $region5
  $region4: #{small_block_forward.1} parent=0 // pred_region
    _
  $region5: #{small_block_forward.1} parent=0 // pred_fallthru
    _
  // Predicated region
  $region6: #{small_block_forward.1} parent=0 // pred_check
    _
  $region7: #{small_block_forward.1} parent=0 // pred_check_branch
    %16 = sbr.rel (0) target = $region9
  $region8: #{small_block_forward.1} parent=0 // pred_region
    _
  $region9: #{small_block_forward.1} parent=0 // pred_fallthru
    _
  // Predicated region
  $region10: #{small_block_forward.1} parent=0 // pred_check
    _
  $region11: #{small_block_forward.1} parent=0 // pred_check_branch
    %18 = sbr.rel (0) target = $region13
  $region12: #{small_block_forward.1} parent=0 // pred_region
    _
  $region13: #{small_block_forward.1} parent=0 // pred_fallthru
    _
  // Predicated region
  $region14: #{small_block_forward.1} parent=0 // pred_check
    _
  $region15: #{small_block_forward.1} parent=0 // pred_check_branch
    %20 = sbr.rel (0) target = $region17
  $region16: #{small_block_forward.1} parent=0 // pred_region
    _
  $region17: #{small_block_forward.1} parent=0 // pred_fallthru
    _
  // Predicated region
  $region18: #{small_block_forward.1} parent=0 // pred_check
    _
  $region19: #{small_block_forward.1} parent=0 // pred_check_branch
    %22 = sbr.rel (0) target = $region21
  $region20: #{small_block_forward.1} parent=0 // pred_region
    _
  $region21: #{small_block_forward.1} parent=0 // pred_fallthru
    _
  // Predicated region
  $region22: #{small_block_forward.1} parent=0 // pred_check
    _
  $region23: #{small_block_forward.1} parent=0 // pred_check_branch
    %24 = sbr.rel (0) target = $region25
  $region24: #{small_block_forward.1} parent=0 // pred_region
    _
  $region25: #{small_block_forward.1} parent=0 // pred_fallthru
    _
  // Predicated region
  $region26: #{small_block_forward.1} parent=0 // pred_check
    _
  $region27: #{small_block_forward.1} parent=0 // pred_check_branch
    %26 = sbr.rel (0) target = $region29
  $region28: #{small_block_forward.1} parent=0 // pred_region
    _
  $region29: #{small_block_forward.1} parent=0 // pred_fallthru
    _
  // Predicated region
  $region30: #{small_block_forward.1} parent=0 // pred_check
    _
  $region31: #{small_block_forward.1} parent=0 // pred_check_branch
    %28 = sbr.rel (0) target = $region33
  $region32: #{small_block_forward.1} parent=0 // pred_region
    _
  $region33: #{small_block_forward.1} parent=0 // pred_fallthru
    _
  %v29 = vld [vmem:[%s7] sm:$0xff]
  %v30 = vld [vmem:[%s7 + $0x8] sm:$0xff]
  %v31 = vld [vmem:[%s7 + $0x10] sm:$0xff]
  %v32 = vld [vmem:[%s7 + $0x18] sm:$0xff]
  %v33 = vld [vmem:[%s7 + $0x20] sm:$0xff]
  %v34 = vld [vmem:[%s7 + $0x28] sm:$0xff]
  %v35 = vld [vmem:[%s7 + $0x30] sm:$0xff]
  %v36 = vld [vmem:[%s7 + $0x38] sm:$0xff]
  %v37 = vld [vmem:[%s7 + $0x40] sm:$0xff]
  %v38 = vld [vmem:[%s7 + $0x48] sm:$0xff]
  %v39 = vld [vmem:[%s7 + $0x50] sm:$0xff]
  %v40 = vld [vmem:[%s7 + $0x58] sm:$0xff]
  %v41 = vld [vmem:[%s7 + $0x60] sm:$0xff]
  %v42 = vld [vmem:[%s7 + $0x68] sm:$0xff]
  %v43 = vld [vmem:[%s7 + $0x70] sm:$0xff]
  %v44 = vld [vmem:[%s7 + $0x78] sm:$0xff]
  %v45 = vld [vmem:[%s0] sm:$0xff]
  %v46 = vld [vmem:[%s0 + $0x8] sm:$0xff]
  %v47 = vld [vmem:[%s0 + $0x10] sm:$0xff]
  %v48 = vld [vmem:[%s0 + $0x18] sm:$0xff]
  %49 = vst [vmem:[#allocation2] sm:$0x1] 0.0
  %50 = vst [vmem:[#allocation2 + $0x18] sm:$0x1] 0.0
  %51 = vst [vmem:[#allocation2 + $0x11] sm:$0x1] 0.0
  %52 = vst [vmem:[#allocation2 + $0x29] sm:$0x1] 0.0
  %53 = vst [vmem:[#allocation2 + $0x1] sm:$0xff] %v45
  %54 = vst [vmem:[#allocation2 + $0x9] sm:$0xff] %v46
  %55 = vst [vmem:[#allocation2 + $0x19] sm:$0xff] %v47
  %56 = vst [vmem:[#allocation2 + $0x21] sm:$0xff] %v48
  %v57 = vld [vmem:[#allocation2] sm:$0xff]
  %v58 = vld [vmem:[#allocation2 + $0x8] sm:$0xff]
  %v59 = vld [vmem:[#allocation2 + $0x18] sm:$0xff]
  %v60 = vld [vmem:[#allocation2 + $0x20] sm:$0xff]
  %v61 = vld [vmem:[%s1] sm:$0xff]
  %v62 = vld [vmem:[%s1 + $0x8] sm:$0xff]
  %v63 = vld [vmem:[%s1 + $0x10] sm:$0xff]
  %v64 = vld [vmem:[%s1 + $0x18] sm:$0xff]
  %v65 = vld [vmem:[%s1 + $0x20] sm:$0xff]
  %v66 = vld [vmem:[%s1 + $0x28] sm:$0xff]
  %v67 = vld [vmem:[%s1 + $0x30] sm:$0xff]
  %v68 = vld [vmem:[%s1 + $0x38] sm:$0xff]
  %v69 = vld [vmem:[%s1 + $0x40] sm:$0xff]
  %v70 = vld [vmem:[%s1 + $0x48] sm:$0xff]
  %v71 = vld [vmem:[%s1 + $0x50] sm:$0xff]
  %v72 = vld [vmem:[%s1 + $0x58] sm:$0xff]
  %v73 = vld [vmem:[%s1 + $0x60] sm:$0xff]
  %v74 = vld [vmem:[%s1 + $0x68] sm:$0xff]
  %v75 = vld [vmem:[%s1 + $0x70] sm:$0xff]
  %v76 = vld [vmem:[%s1 + $0x78] sm:$0xff]
  %v77 = vld [vmem:[#allocation2 + $0x1] sm:$0xff]
  %v78 = vld [vmem:[#allocation2 + $0x9] sm:$0xff]
  %v79 = vld [vmem:[#allocation2 + $0x19] sm:$0xff]
  %v80 = vld [vmem:[#allocation2 + $0x21] sm:$0xff]
  %s81 = scalar_lea.vmem %s1, 128
  %v82 = vld [vmem:[%s81] sm:$0xff]
  %v83 = vld [vmem:[%s81 + $0x8] sm:$0xff]
  %v84 = vld [vmem:[%s81 + $0x10] sm:$0xff]
  %v85 = vld [vmem:[%s81 + $0x18] sm:$0xff]
  %v86 = vld [vmem:[%s81 + $0x20] sm:$0xff]
  %v87 = vld [vmem:[%s81 + $0x28] sm:$0xff]
  %v88 = vld [vmem:[%s81 + $0x30] sm:$0xff]
  %v89 = vld [vmem:[%s81 + $0x38] sm:$0xff]
  %v90 = vld [vmem:[%s81 + $0x40] sm:$0xff]
  %v91 = vld [vmem:[%s81 + $0x48] sm:$0xff]
  %v92 = vld [vmem:[%s81 + $0x50] sm:$0xff]
  %v93 = vld [vmem:[%s81 + $0x58] sm:$0xff]
  %v94 = vld [vmem:[%s81 + $0x60] sm:$0xff]
  %v95 = vld [vmem:[%s81 + $0x68] sm:$0xff]
  %v96 = vld [vmem:[%s81 + $0x70] sm:$0xff]
  %v97 = vld [vmem:[%s81 + $0x78] sm:$0xff]
  %98 = vmatprep.subr.mxu0 0.0
  %99 = vmatpush1.msra.mxu0 %v82
  %100 = vmatprep.subr.mxu0 0.0
  %101 = vmatpush1.msra.mxu0 %v83
  %102 = vmatprep.subr.mxu0 0.0
  %103 = vmatpush1.msra.mxu0 %v84
  %104 = vmatprep.subr.mxu0 0.0
  %105 = vmatpush1.msra.mxu0 %v85
  %106 = vmatprep.subr.mxu0 0.0
  %107 = vmatpush1.msra.mxu0 %v86
  %108 = vmatprep.subr.mxu0 0.0
  %109 = vmatpush1.msra.mxu0 %v87
  %110 = vmatprep.subr.mxu0 0.0
  %111 = vmatpush1.msra.mxu0 %v88
  %112 = vmatprep.subr.mxu0 0.0
  %113 = vmatpush1.msra.mxu0 %v89
  %114 = vmatprep.subr.mxu0 0.0
  %115 = vmatpush1.msra.mxu0 %v90
  %116 = vmatprep.subr.mxu0 0.0
  %117 = vmatpush1.msra.mxu0 %v91
  %118 = vmatprep.subr.mxu0 0.0
  %119 = vmatpush1.msra.mxu0 %v92
  %120 = vmatprep.subr.mxu0 0.0
  %121 = vmatpush1.msra.mxu0 %v93
  %122 = vmatprep.subr.mxu0 0.0
  %123 = vmatpush1.msra.mxu0 %v94
  %124 = vmatprep.subr.mxu0 0.0
  %125 = vmatpush1.msra.mxu0 %v95
  %126 = vmatprep.subr.mxu0 0.0
  %127 = vmatpush1.msra.mxu0 %v96
  %128 = vmatprep.subr.mxu0 0.0
  %129 = vmatpush1.msra.mxu0 %v97
  %130 = vmatprep.subr.mxu0 0.0
  %131 = vmatpush1.msra.mxu0 0.0
  %132 = vmatprep.subr.mxu0 0.0
  %133 = vmatpush1.msra.mxu0 0.0
  %134 = vmatprep.subr.mxu0 0.0
  %135 = vmatpush1.msra.mxu0 0.0
  %136 = vmatprep.subr.mxu0 0.0
  %137 = vmatpush1.msra.mxu0 0.0
  %138 = vmatprep.subr.mxu0 0.0
  %139 = vmatpush1.msra.mxu0 0.0
  %140 = vmatprep.subr.mxu0 0.0
  %141 = vmatpush1.msra.mxu0 0.0
  %142 = vmatprep.subr.mxu0 0.0
  %143 = vmatpush1.msra.mxu0 0.0
  %144 = vmatprep.subr.mxu0 0.0
  %145 = vmatpush1.msra.mxu0 0.0
  %146 = vmatprep.subr.mxu0 0.0
  %147 = vmatpush1.msra.mxu0 0.0
  %148 = vmatprep.subr.mxu0 0.0
  %149 = vmatpush1.msra.mxu0 0.0
  %150 = vmatprep.subr.mxu0 0.0
  %151 = vmatpush1.msra.mxu0 0.0
  %152 = vmatprep.subr.mxu0 0.0
  %153 = vmatpush1.msra.mxu0 0.0
  %154 = vmatprep.subr.mxu0 0.0
  %155 = vmatpush1.msra.mxu0 0.0
  %156 = vmatprep.subr.mxu0 0.0
  %157 = vmatpush1.msra.mxu0 0.0
  %158 = vmatprep.subr.mxu0 0.0
  %159 = vmatpush1.msra.mxu0 0.0
  %160 = vmatprep.subr.mxu0 0.0
  %161 = vmatpush1.msra.mxu0 0.0
  %162 = vmatprep.mubr.f32.mxu0 0.0
  %163 = vmatmul.mubr.f32.gmra.mrb[0].mxu0 %v77
  %v164 = vpop.f32.mrb[0].mxu0
  %v165 = vadd.f32 0.0, %v164
  %v166 = vpop.f32.mrb[0].mxu0
  %167 = vmatprep.mubr.f32.mxu0 0.0
  %168 = vmatmul.mubr.f32.gmra.mrb[0].mxu0 %v78
  %v169 = vpop.f32.mrb[0].mxu0
  %v170 = vadd.f32 0.0, %v169
  %v171 = vpop.f32.mrb[0].mxu0
  %172 = vmatprep.mubr.f32.mxu0 0.0
  %173 = vmatmul.mubr.f32.gmra.mrb[0].mxu0 %v79
  %v174 = vpop.f32.mrb[0].mxu0
  %v175 = vadd.f32 0.0, %v174
  %v176 = vpop.f32.mrb[0].mxu0
  %177 = vmatprep.mubr.f32.mxu0 0.0
  %178 = vmatmul.mubr.f32.gmra.mrb[0].mxu0 %v80
  %v179 = vpop.f32.mrb[0].mxu0
  %v180 = vadd.f32 0.0, %v179
  %v181 = vpop.f32.mrb[0].mxu0
  %182 = vdwg.mxu0
  %183 = vmatprep.subr.mxu0 0.0
  %184 = vmatpush1.msra.mxu0 %v61
  %185 = vmatprep.subr.mxu0 0.0
  %186 = vmatpush1.msra.mxu0 %v62
  %187 = vmatprep.subr.mxu0 0.0
  %188 = vmatpush1.msra.mxu0 %v63
  %189 = vmatprep.subr.mxu0 0.0
  %190 = vmatpush1.msra.mxu0 %v64
  %191 = vmatprep.subr.mxu0 0.0
  %192 = vmatpush1.msra.mxu0 %v65
  %193 = vmatprep.subr.mxu0 0.0
  %194 = vmatpush1.msra.mxu0 %v66
  %195 = vmatprep.subr.mxu0 0.0
  %196 = vmatpush1.msra.mxu0 %v67
  %197 = vmatprep.subr.mxu0 0.0
  %198 = vmatpush1.msra.mxu0 %v68
  %199 = vmatprep.subr.mxu0 0.0
  %200 = vmatpush1.msra.mxu0 %v69
  %201 = vmatprep.subr.mxu0 0.0
  %202 = vmatpush1.msra.mxu0 %v70
  %203 = vmatprep.subr.mxu0 0.0
  %204 = vmatpush1.msra.mxu0 %v71
  %205 = vmatprep.subr.mxu0 0.0
  %206 = vmatpush1.msra.mxu0 %v72
  %207 = vmatprep.subr.mxu0 0.0
  %208 = vmatpush1.msra.mxu0 %v73
  %209 = vmatprep.subr.mxu0 0.0
  %210 = vmatpush1.msra.mxu0 %v74
  %211 = vmatprep.subr.mxu0 0.0
  %212 = vmatpush1.msra.mxu0 %v75
  %213 = vmatprep.subr.mxu0 0.0
  %214 = vmatpush1.msra.mxu0 %v76
  %215 = vmatprep.subr.mxu0 0.0
  %216 = vmatpush1.msra.mxu0 0.0
  %217 = vmatprep.subr.mxu0 0.0
  %218 = vmatpush1.msra.mxu0 0.0
  %219 = vmatprep.subr.mxu0 0.0
  %220 = vmatpush1.msra.mxu0 0.0
  %221 = vmatprep.subr.mxu0 0.0
  %222 = vmatpush1.msra.mxu0 0.0
  %223 = vmatprep.subr.mxu0 0.0
  %224 = vmatpush1.msra.mxu0 0.0
  %225 = vmatprep.subr.mxu0 0.0
  %226 = vmatpush1.msra.mxu0 0.0
  %227 = vmatprep.subr.mxu0 0.0
  %228 = vmatpush1.msra.mxu0 0.0
  %229 = vmatprep.subr.mxu0 0.0
  %230 = vmatpush1.msra.mxu0 0.0
  %231 = vmatprep.subr.mxu0 0.0
  %232 = vmatpush1.msra.mxu0 0.0
  %233 = vmatprep.subr.mxu0 0.0
  %234 = vmatpush1.msra.mxu0 0.0
  %235 = vmatprep.subr.mxu0 0.0
  %236 = vmatpush1.msra.mxu0 0.0
  %237 = vmatprep.subr.mxu0 0.0
  %238 = vmatpush1.msra.mxu0 0.0
  %239 = vmatprep.subr.mxu0 0.0
  %240 = vmatpush1.msra.mxu0 0.0
  %241 = vmatprep.subr.mxu0 0.0
  %242 = vmatpush1.msra.mxu0 0.0
  %243 = vmatprep.subr.mxu0 0.0
  %244 = vmatpush1.msra.mxu0 0.0
  %245 = vmatprep.subr.mxu0 0.0
  %246 = vmatpush1.msra.mxu0 0.0
  %247 = vmatprep.mubr.f32.mxu0 0.0
  %248 = vmatmul.mubr.f32.gmra.mrb[0].mxu0 %v57
  %v249 = vpop.f32.mrb[0].mxu0
  %v250 = vadd.f32 %v165, %v249
  %v251 = vpop.f32.mrb[0].mxu0
  %252 = vmatprep.mubr.f32.mxu0 0.0
  %253 = vmatmul.mubr.f32.gmra.mrb[0].mxu0 %v58
  %v254 = vpop.f32.mrb[0].mxu0
  %v255 = vadd.f32 %v170, %v254
  %v256 = vpop.f32.mrb[0].mxu0
  %257 = vmatprep.mubr.f32.mxu0 0.0
  %258 = vmatmul.mubr.f32.gmra.mrb[0].mxu0 %v59
  %v259 = vpop.f32.mrb[0].mxu0
  %v260 = vadd.f32 %v175, %v259
  %v261 = vpop.f32.mrb[0].mxu0
  %262 = vmatprep.mubr.f32.mxu0 0.0
  %263 = vmatmul.mubr.f32.gmra.mrb[0].mxu0 %v60
  %v264 = vpop.f32.mrb[0].mxu0
  %v265 = vadd.f32 %v180, %v264
  %v266 = vpop.f32.mrb[0].mxu0
  %267 = vdwg.mxu0
  %v268 = vld [vmem:[#allocation2 + $0x2] sm:$0xff]
  %v269 = vld [vmem:[#allocation2 + $0xa] sm:$0xff]
  %v270 = vld [vmem:[#allocation2 + $0x1a] sm:$0xff]
  %v271 = vld [vmem:[#allocation2 + $0x22] sm:$0xff]
  %s272 = scalar_lea.vmem %s1, 256
  %v273 = vld [vmem:[%s272] sm:$0xff]
  %v274 = vld [vmem:[%s272 + $0x8] sm:$0xff]
  %v275 = vld [vmem:[%s272 + $0x10] sm:$0xff]
  %v276 = vld [vmem:[%s272 + $0x18] sm:$0xff]
  %v277 = vld [vmem:[%s272 + $0x20] sm:$0xff]
  %v278 = vld [vmem:[%s272 + $0x28] sm:$0xff]
  %v279 = vld [vmem:[%s272 + $0x30] sm:$0xff]
  %v280 = vld [vmem:[%s272 + $0x38] sm:$0xff]
  %v281 = vld [vmem:[%s272 + $0x40] sm:$0xff]
  %v282 = vld [vmem:[%s272 + $0x48] sm:$0xff]
  %v283 = vld [vmem:[%s272 + $0x50] sm:$0xff]
  %v284 = vld [vmem:[%s272 + $0x58] sm:$0xff]
  %v285 = vld [vmem:[%s272 + $0x60] sm:$0xff]
  %v286 = vld [vmem:[%s272 + $0x68] sm:$0xff]
  %v287 = vld [vmem:[%s272 + $0x70] sm:$0xff]
  %v288 = vld [vmem:[%s272 + $0x78] sm:$0xff]
  %289 = vmatprep.subr.mxu0 0.0
  %290 = vmatpush1.msra.mxu0 %v273
  %291 = vmatprep.subr.mxu0 0.0
  %292 = vmatpush1.msra.mxu0 %v274
  %293 = vmatprep.subr.mxu0 0.0
  %294 = vmatpush1.msra.mxu0 %v275
  %295 = vmatprep.subr.mxu0 0.0
  %296 = vmatpush1.msra.mxu0 %v276
  %297 = vmatprep.subr.mxu0 0.0
  %298 = vmatpush1.msra.mxu0 %v277
  %299 = vmatprep.subr.mxu0 0.0
  %300 = vmatpush1.msra.mxu0 %v278
  %301 = vmatprep.subr.mxu0 0.0
  %302 = vmatpush1.msra.mxu0 %v279
  %303 = vmatprep.subr.mxu0 0.0
  %304 = vmatpush1.msra.mxu0 %v280
  %305 = vmatprep.subr.mxu0 0.0
  %306 = vmatpush1.msra.mxu0 %v281
  %307 = vmatprep.subr.mxu0 0.0
  %308 = vmatpush1.msra.mxu0 %v282
  %309 = vmatprep.subr.mxu0 0.0
  %310 = vmatpush1.msra.mxu0 %v283
  %311 = vmatprep.subr.mxu0 0.0
  %312 = vmatpush1.msra.mxu0 %v284
  %313 = vmatprep.subr.mxu0 0.0
  %314 = vmatpush1.msra.mxu0 %v285
  %315 = vmatprep.subr.mxu0 0.0
  %316 = vmatpush1.msra.mxu0 %v286
  %317 = vmatprep.subr.mxu0 0.0
  %318 = vmatpush1.msra.mxu0 %v287
  %319 = vmatprep.subr.mxu0 0.0
  %320 = vmatpush1.msra.mxu0 %v288
  %321 = vmatprep.subr.mxu0 0.0
  %322 = vmatpush1.msra.mxu0 0.0
  %323 = vmatprep.subr.mxu0 0.0
  %324 = vmatpush1.msra.mxu0 0.0
  %325 = vmatprep.subr.mxu0 0.0
  %326 = vmatpush1.msra.mxu0 0.0
  %327 = vmatprep.subr.mxu0 0.0
  %328 = vmatpush1.msra.mxu0 0.0
  %329 = vmatprep.subr.mxu0 0.0
  %330 = vmatpush1.msra.mxu0 0.0
  %331 = vmatprep.subr.mxu0 0.0
  %332 = vmatpush1.msra.mxu0 0.0
  %333 = vmatprep.subr.mxu0 0.0
  %334 = vmatpush1.msra.mxu0 0.0
  %335 = vmatprep.subr.mxu0 0.0
  %336 = vmatpush1.msra.mxu0 0.0
  %337 = vmatprep.subr.mxu0 0.0
  %338 = vmatpush1.msra.mxu0 0.0
  %339 = vmatprep.subr.mxu0 0.0
  %340 = vmatpush1.msra.mxu0 0.0
  %341 = vmatprep.subr.mxu0 0.0
  %342 = vmatpush1.msra.mxu0 0.0
  %343 = vmatprep.subr.mxu0 0.0
  %344 = vmatpush1.msra.mxu0 0.0
  %345 = vmatprep.subr.mxu0 0.0
  %346 = vmatpush1.msra.mxu0 0.0
  %347 = vmatprep.subr.mxu0 0.0
  %348 = vmatpush1.msra.mxu0 0.0
  %349 = vmatprep.subr.mxu0 0.0
  %350 = vmatpush1.msra.mxu0 0.0
  %351 = vmatprep.subr.mxu0 0.0
  %352 = vmatpush1.msra.mxu0 0.0
  %353 = vmatprep.mubr.f32.mxu0 0.0
  %354 = vmatmul.mubr.f32.gmra.mrb[0].mxu0 %v268
  %v355 = vpop.f32.mrb[0].mxu0
  %v356 = vadd.f32 0.0, %v355
  %v357 = vpop.f32.mrb[0].mxu0
  %358 = vmatprep.mubr.f32.mxu0 0.0
  %359 = vmatmul.mubr.f32.gmra.mrb[0].mxu0 %v269
  %v360 = vpop.f32.mrb[0].mxu0
  %v361 = vadd.f32 0.0, %v360
  %v362 = vpop.f32.mrb[0].mxu0
  %363 = vmatprep.mubr.f32.mxu0 0.0
  %364 = vmatmul.mubr.f32.gmra.mrb[0].mxu0 %v270
  %v365 = vpop.f32.mrb[0].mxu0
  %v366 = vadd.f32 0.0, %v365
  %v367 = vpop.f32.mrb[0].mxu0
  %368 = vmatprep.mubr.f32.mxu0 0.0
  %369 = vmatmul.mubr.f32.gmra.mrb[0].mxu0 %v271
  %v370 = vpop.f32.mrb[0].mxu0
  %v371 = vadd.f32 0.0, %v370
  %v372 = vpop.f32.mrb[0].mxu0
  %373 = vdwg.mxu0
  %v374 = vadd.f32 %v250, %v356
  %v375 = vadd.f32 %v255, %v361
  %v376 = vadd.f32 %v260, %v366
  %v377 = vadd.f32 %v265, %v371
  %v378 = vadd.f32 %v374, %v375
  %v379 = vadd.f32 %v378, %v376
  %v380 = vadd.f32 %v379, %v377
  %v381 = vrot.slane %v380, 4
  %v382 = vadd.f32 %v380, %v381
  %v383 = vrot.slane %v382, 2
  %v384 = vadd.f32 %v382, %v383
  %v385 = vrot.slane %v384, 1
  %v386 = vadd.f32 %v384, %v385
  %v387 = vmul.f32 %v374, %v374
  %v388 = vmul.f32 %v375, %v375
  %v389 = vmul.f32 %v376, %v376
  %v390 = vmul.f32 %v377, %v377
  %v391 = vadd.f32 %v387, %v388
  %v392 = vadd.f32 %v391, %v389
  %v393 = vadd.f32 %v392, %v390
  %v394 = vrot.slane %v393, 4
  %v395 = vadd.f32 %v393, %v394
  %v396 = vrot.slane %v395, 2
  %v397 = vadd.f32 %v395, %v396
  %v398 = vrot.slane %v397, 1
  %v399 = vadd.f32 %v397, %v398
  %vm400 = vcmask 1040384
  %v401 = vsel %vm400, %v386, %v399
  %402 = vmatprep.subr.mxu0 0.0
  %403 = vmatpush1.msra.mxu0 %v29
  %404 = vmatprep.subr.mxu0 0.0
  %405 = vmatpush1.msra.mxu0 %v30
  %406 = vmatprep.subr.mxu0 0.0
  %407 = vmatpush1.msra.mxu0 %v31
  %408 = vmatprep.subr.mxu0 0.0
  %409 = vmatpush1.msra.mxu0 %v32
  %410 = vmatprep.subr.mxu0 0.0
  %411 = vmatpush1.msra.mxu0 %v33
  %412 = vmatprep.subr.mxu0 0.0
  %413 = vmatpush1.msra.mxu0 %v34
  %414 = vmatprep.subr.mxu0 0.0
  %415 = vmatpush1.msra.mxu0 %v35
  %416 = vmatprep.subr.mxu0 0.0
  %417 = vmatpush1.msra.mxu0 %v36
  %418 = vmatprep.subr.mxu0 0.0
  %419 = vmatpush1.msra.mxu0 %v37
  %420 = vmatprep.subr.mxu0 0.0
  %421 = vmatpush1.msra.mxu0 %v38
  %422 = vmatprep.subr.mxu0 0.0
  %423 = vmatpush1.msra.mxu0 %v39
  %424 = vmatprep.subr.mxu0 0.0
  %425 = vmatpush1.msra.mxu0 %v40
  %426 = vmatprep.subr.mxu0 0.0
  %427 = vmatpush1.msra.mxu0 %v41
  %428 = vmatprep.subr.mxu0 0.0
  %429 = vmatpush1.msra.mxu0 %v42
  %430 = vmatprep.subr.mxu0 0.0
  %431 = vmatpush1.msra.mxu0 %v43
  %432 = vmatprep.subr.mxu0 0.0
  %433 = vmatpush1.msra.mxu0 %v44
  %434 = vmatprep.subr.mxu0 0.0
  %435 = vmatpush1.msra.mxu0 0.0
  %436 = vmatprep.subr.mxu0 0.0
  %437 = vmatpush1.msra.mxu0 0.0
  %438 = vmatprep.subr.mxu0 0.0
  %439 = vmatpush1.msra.mxu0 0.0
  %440 = vmatprep.subr.mxu0 0.0
  %441 = vmatpush1.msra.mxu0 0.0
  %442 = vmatprep.subr.mxu0 0.0
  %443 = vmatpush1.msra.mxu0 0.0
  %444 = vmatprep.subr.mxu0 0.0
  %445 = vmatpush1.msra.mxu0 0.0
  %446 = vmatprep.subr.mxu0 0.0
  %447 = vmatpush1.msra.mxu0 0.0
  %448 = vmatprep.subr.mxu0 0.0
  %449 = vmatpush1.msra.mxu0 0.0
  %450 = vmatprep.subr.mxu0 0.0
  %451 = vmatpush1.msra.mxu0 0.0
  %452 = vmatprep.subr.mxu0 0.0
  %453 = vmatpush1.msra.mxu0 0.0
  %454 = vmatprep.subr.mxu0 0.0
  %455 = vmatpush1.msra.mxu0 0.0
  %456 = vmatprep.subr.mxu0 0.0
  %457 = vmatpush1.msra.mxu0 0.0
  %458 = vmatprep.subr.mxu0 0.0
  %459 = vmatpush1.msra.mxu0 0.0
  %460 = vmatprep.subr.mxu0 0.0
  %461 = vmatpush1.msra.mxu0 0.0
  %462 = vmatprep.subr.mxu0 0.0
  %463 = vmatpush1.msra.mxu0 0.0
  %464 = vmatprep.subr.mxu0 0.0
  %465 = vmatpush1.msra.mxu0 0.0
  %466 = vmatprep.mubr.f32.mxu0 0.0
  %467 = vmatmul.mubr.f32.gmra.mrb[0].mxu0 %v401
  %v468 = vpop.f32.mrb[0].mxu0
  %v469 = vadd.f32 0.0, %v468
  %v470 = vpop.f32.mrb[0].mxu0
  %471 = vdwg.mxu0
  %v472 = vmul.f32 %v469, 0.001953125
  %v473 = vmul.f32 %v472, %v472
  %v475 = vrot.slane %v473, 7
  %v477 = vsub.f32 %v472, %v475
  %v478 = vld [vmem:[%s3] sm:$0x1]
  %v479 = vadd.f32 %v477, 1e-05
  %v480 = vrsqrt.pop %v479
  %v483 = vunpack.c.l.s4 1966171168
  %v484 = vunpack.c.0.s8 %v483
  %v485 = vlaneseq
  %v486 = vshrl.u32 %v485, 7
  %v487 = vsub.s32 %v484, %v486
  %v488 = vrot.slane %v480, %v487
  %v489 = vcombine.high %v488, %v488
  %v491 = vunpack.c.l.s4 1966171168
  %v492 = vunpack.c.0.s8 %v491
  %v493 = vlaneseq
  %v494 = vshrl.u32 %v493, 7
  %v495 = vsub.s32 %v492, %v494
  %v496 = vrot.slane %v489, %v495
  %v498 = vmul.f32 %v478, %v496
  %v499 = vld [vmem:[%s4] sm:$0x1]
  %v500 = vmul.f32 %v472, %v498
  %v501 = vsub.f32 %v499, %v500
  %v503 = vlaneseq
  %v504 = vshrl.u32 %v503, 7
  %v505 = vsub.s32 0, %v504
  %v506 = vrot.slane %v498, %v505
  %v508 = vmul.f32 %v374, %v506
  %v509 = vmul.f32 %v375, %v506
  %v510 = vmul.f32 %v376, %v506
  %v511 = vmul.f32 %v377, %v506
  %v513 = vlaneseq
  %v514 = vshrl.u32 %v513, 7
  %v515 = vsub.s32 0, %v514
  %v516 = vrot.slane %v501, %v515
  %v518 = vadd.f32 %v508, %v516
  %v519 = vadd.f32 %v509, %v516
  %v520 = vadd.f32 %v510, %v516
  %v521 = vadd.f32 %v511, %v516
  %v522 = vmax.f32 %v518, 0.0
  %v523 = vmax.f32 %v519, 0.0
  %v524 = vmax.f32 %v520, 0.0
  %v525 = vmax.f32 %v521, 0.0
  %526 = vst [vmem:[#allocation2 + $0x1] sm:$0xff] %v522
  %527 = vst [vmem:[#allocation2 + $0x9] sm:$0xff] %v523
  %528 = vst [vmem:[#allocation2 + $0x19] sm:$0xff] %v524
  %529 = vst [vmem:[#allocation2 + $0x21] sm:$0xff] %v525
  %v530 = vld [vmem:[#allocation2] sm:$0xff]
  %v531 = vld [vmem:[#allocation2 + $0x8] sm:$0xff]
  %v532 = vld [vmem:[#allocation2 + $0x18] sm:$0xff]
  %v533 = vld [vmem:[#allocation2 + $0x20] sm:$0xff]
  %v534 = vld [vmem:[%s2] sm:$0xff]
  %v535 = vld [vmem:[%s2 + $0x8] sm:$0xff]
  %v536 = vld [vmem:[%s2 + $0x10] sm:$0xff]
  %v537 = vld [vmem:[%s2 + $0x18] sm:$0xff]
  %v538 = vld [vmem:[%s2 + $0x20] sm:$0xff]
  %v539 = vld [vmem:[%s2 + $0x28] sm:$0xff]
  %v540 = vld [vmem:[%s2 + $0x30] sm:$0xff]
  %v541 = vld [vmem:[%s2 + $0x38] sm:$0xff]
  %v542 = vld [vmem:[%s2 + $0x40] sm:$0xff]
  %v543 = vld [vmem:[%s2 + $0x48] sm:$0xff]
  %v544 = vld [vmem:[%s2 + $0x50] sm:$0xff]
  %v545 = vld [vmem:[%s2 + $0x58] sm:$0xff]
  %v546 = vld [vmem:[%s2 + $0x60] sm:$0xff]
  %v547 = vld [vmem:[%s2 + $0x68] sm:$0xff]
  %v548 = vld [vmem:[%s2 + $0x70] sm:$0xff]
  %v549 = vld [vmem:[%s2 + $0x78] sm:$0xff]
  %v550 = vld [vmem:[#allocation2 + $0x1] sm:$0xff]
  %v551 = vld [vmem:[#allocation2 + $0x9] sm:$0xff]
  %v552 = vld [vmem:[#allocation2 + $0x19] sm:$0xff]
  %v553 = vld [vmem:[#allocation2 + $0x21] sm:$0xff]
  %s554 = scalar_lea.vmem %s2, 128
  %v555 = vld [vmem:[%s554] sm:$0xff]
  %v556 = vld [vmem:[%s554 + $0x8] sm:$0xff]
  %v557 = vld [vmem:[%s554 + $0x10] sm:$0xff]
  %v558 = vld [vmem:[%s554 + $0x18] sm:$0xff]
  %v559 = vld [vmem:[%s554 + $0x20] sm:$0xff]
  %v560 = vld [vmem:[%s554 + $0x28] sm:$0xff]
  %v561 = vld [vmem:[%s554 + $0x30] sm:$0xff]
  %v562 = vld [vmem:[%s554 + $0x38] sm:$0xff]
  %v563 = vld [vmem:[%s554 + $0x40] sm:$0xff]
  %v564 = vld [vmem:[%s554 + $0x48] sm:$0xff]
  %v565 = vld [vmem:[%s554 + $0x50] sm:$0xff]
  %v566 = vld [vmem:[%s554 + $0x58] sm:$0xff]
  %v567 = vld [vmem:[%s554 + $0x60] sm:$0xff]
  %v568 = vld [vmem:[%s554 + $0x68] sm:$0xff]
  %v569 = vld [vmem:[%s554 + $0x70] sm:$0xff]
  %v570 = vld [vmem:[%s554 + $0x78] sm:$0xff]
  %571 = vmatprep.subr.mxu0 0.0
  %572 = vmatpush1.msra.mxu0 %v555
  %573 = vmatprep.subr.mxu0 0.0
  %574 = vmatpush1.msra.mxu0 %v556
  %575 = vmatprep.subr.mxu0 0.0
  %576 = vmatpush1.msra.mxu0 %v557
  %577 = vmatprep.subr.mxu0 0.0
  %578 = vmatpush1.msra.mxu0 %v558
  %579 = vmatprep.subr.mxu0 0.0
  %580 = vmatpush1.msra.mxu0 %v559
  %581 = vmatprep.subr.mxu0 0.0
  %582 = vmatpush1.msra.mxu0 %v560
  %583 = vmatprep.subr.mxu0 0.0
  %584 = vmatpush1.msra.mxu0 %v561
  %585 = vmatprep.subr.mxu0 0.0
  %586 = vmatpush1.msra.mxu0 %v562
  %587 = vmatprep.subr.mxu0 0.0
  %588 = vmatpush1.msra.mxu0 %v563
  %589 = vmatprep.subr.mxu0 0.0
  %590 = vmatpush1.msra.mxu0 %v564
  %591 = vmatprep.subr.mxu0 0.0
  %592 = vmatpush1.msra.mxu0 %v565
  %593 = vmatprep.subr.mxu0 0.0
  %594 = vmatpush1.msra.mxu0 %v566
  %595 = vmatprep.subr.mxu0 0.0
  %596 = vmatpush1.msra.mxu0 %v567
  %597 = vmatprep.subr.mxu0 0.0
  %598 = vmatpush1.msra.mxu0 %v568
  %599 = vmatprep.subr.mxu0 0.0
  %600 = vmatpush1.msra.mxu0 %v569
  %601 = vmatprep.subr.mxu0 0.0
  %602 = vmatpush1.msra.mxu0 %v570
  %603 = vmatprep.subr.mxu0 0.0
  %604 = vmatpush1.msra.mxu0 0.0
  %605 = vmatprep.subr.mxu0 0.0
  %606 = vmatpush1.msra.mxu0 0.0
  %607 = vmatprep.subr.mxu0 0.0
  %608 = vmatpush1.msra.mxu0 0.0
  %609 = vmatprep.subr.mxu0 0.0
  %610 = vmatpush1.msra.mxu0 0.0
  %611 = vmatprep.subr.mxu0 0.0
  %612 = vmatpush1.msra.mxu0 0.0
  %613 = vmatprep.subr.mxu0 0.0
  %614 = vmatpush1.msra.mxu0 0.0
  %615 = vmatprep.subr.mxu0 0.0
  %616 = vmatpush1.msra.mxu0 0.0
  %617 = vmatprep.subr.mxu0 0.0
  %618 = vmatpush1.msra.mxu0 0.0
  %619 = vmatprep.subr.mxu0 0.0
  %620 = vmatpush1.msra.mxu0 0.0
  %621 = vmatprep.subr.mxu0 0.0
  %622 = vmatpush1.msra.mxu0 0.0
  %623 = vmatprep.subr.mxu0 0.0
  %624 = vmatpush1.msra.mxu0 0.0
  %625 = vmatprep.subr.mxu0 0.0
  %626 = vmatpush1.msra.mxu0 0.0
  %627 = vmatprep.subr.mxu0 0.0
  %628 = vmatpush1.msra.mxu0 0.0
  %629 = vmatprep.subr.mxu0 0.0
  %630 = vmatpush1.msra.mxu0 0.0
  %631 = vmatprep.subr.mxu0 0.0
  %632 = vmatpush1.msra.mxu0 0.0
  %633 = vmatprep.subr.mxu0 0.0
  %634 = vmatpush1.msra.mxu0 0.0
  %635 = vmatprep.mubr.f32.mxu0 0.0
  %636 = vmatmul.mubr.f32.gmra.mrb[0].mxu0 %v550
  %v637 = vpop.f32.mrb[0].mxu0
  %v638 = vadd.f32 0.0, %v637
  %v639 = vpop.f32.mrb[0].mxu0
  %640 = vmatprep.mubr.f32.mxu0 0.0
  %641 = vmatmul.mubr.f32.gmra.mrb[0].mxu0 %v551
  %v642 = vpop.f32.mrb[0].mxu0
  %v643 = vadd.f32 0.0, %v642
  %v644 = vpop.f32.mrb[0].mxu0
  %645 = vmatprep.mubr.f32.mxu0 0.0
  %646 = vmatmul.mubr.f32.gmra.mrb[0].mxu0 %v552
  %v647 = vpop.f32.mrb[0].mxu0
  %v648 = vadd.f32 0.0, %v647
  %v649 = vpop.f32.mrb[0].mxu0
  %650 = vmatprep.mubr.f32.mxu0 0.0
  %651 = vmatmul.mubr.f32.gmra.mrb[0].mxu0 %v553
  %v652 = vpop.f32.mrb[0].mxu0
  %v653 = vadd.f32 0.0, %v652
  %v654 = vpop.f32.mrb[0].mxu0
  %655 = vdwg.mxu0
  %656 = vmatprep.subr.mxu0 0.0
  %657 = vmatpush1.msra.mxu0 %v534
  %658 = vmatprep.subr.mxu0 0.0
  %659 = vmatpush1.msra.mxu0 %v535
  %660 = vmatprep.subr.mxu0 0.0
  %661 = vmatpush1.msra.mxu0 %v536
  %662 = vmatprep.subr.mxu0 0.0
  %663 = vmatpush1.msra.mxu0 %v537
  %664 = vmatprep.subr.mxu0 0.0
  %665 = vmatpush1.msra.mxu0 %v538
  %666 = vmatprep.subr.mxu0 0.0
  %667 = vmatpush1.msra.mxu0 %v539
  %668 = vmatprep.subr.mxu0 0.0
  %669 = vmatpush1.msra.mxu0 %v540
  %670 = vmatprep.subr.mxu0 0.0
  %671 = vmatpush1.msra.mxu0 %v541
  %672 = vmatprep.subr.mxu0 0.0
  %673 = vmatpush1.msra.mxu0 %v542
  %674 = vmatprep.subr.mxu0 0.0
  %675 = vmatpush1.msra.mxu0 %v543
  %676 = vmatprep.subr.mxu0 0.0
  %677 = vmatpush1.msra.mxu0 %v544
  %678 = vmatprep.subr.mxu0 0.0
  %679 = vmatpush1.msra.mxu0 %v545
  %680 = vmatprep.subr.mxu0 0.0
  %681 = vmatpush1.msra.mxu0 %v546
  %682 = vmatprep.subr.mxu0 0.0
  %683 = vmatpush1.msra.mxu0 %v547
  %684 = vmatprep.subr.mxu0 0.0
  %685 = vmatpush1.msra.mxu0 %v548
  %686 = vmatprep.subr.mxu0 0.0
  %687 = vmatpush1.msra.mxu0 %v549
  %688 = vmatprep.subr.mxu0 0.0
  %689 = vmatpush1.msra.mxu0 0.0
  %690 = vmatprep.subr.mxu0 0.0
  %691 = vmatpush1.msra.mxu0 0.0
  %692 = vmatprep.subr.mxu0 0.0
  %693 = vmatpush1.msra.mxu0 0.0
  %694 = vmatprep.subr.mxu0 0.0
  %695 = vmatpush1.msra.mxu0 0.0
  %696 = vmatprep.subr.mxu0 0.0
  %697 = vmatpush1.msra.mxu0 0.0
  %698 = vmatprep.subr.mxu0 0.0
  %699 = vmatpush1.msra.mxu0 0.0
  %700 = vmatprep.subr.mxu0 0.0
  %701 = vmatpush1.msra.mxu0 0.0
  %702 = vmatprep.subr.mxu0 0.0
  %703 = vmatpush1.msra.mxu0 0.0
  %704 = vmatprep.subr.mxu0 0.0
  %705 = vmatpush1.msra.mxu0 0.0
  %706 = vmatprep.subr.mxu0 0.0
  %707 = vmatpush1.msra.mxu0 0.0
  %708 = vmatprep.subr.mxu0 0.0
  %709 = vmatpush1.msra.mxu0 0.0
  %710 = vmatprep.subr.mxu0 0.0
  %711 = vmatpush1.msra.mxu0 0.0
  %712 = vmatprep.subr.mxu0 0.0
  %713 = vmatpush1.msra.mxu0 0.0
  %714 = vmatprep.subr.mxu0 0.0
  %715 = vmatpush1.msra.mxu0 0.0
  %716 = vmatprep.subr.mxu0 0.0
  %717 = vmatpush1.msra.mxu0 0.0
  %718 = vmatprep.subr.mxu0 0.0
  %719 = vmatpush1.msra.mxu0 0.0
  %720 = vmatprep.mubr.f32.mxu0 0.0
  %721 = vmatmul.mubr.f32.gmra.mrb[0].mxu0 %v530
  %v722 = vpop.f32.mrb[0].mxu0
  %v723 = vadd.f32 %v638, %v722
  %v724 = vpop.f32.mrb[0].mxu0
  %725 = vmatprep.mubr.f32.mxu0 0.0
  %726 = vmatmul.mubr.f32.gmra.mrb[0].mxu0 %v531
  %v727 = vpop.f32.mrb[0].mxu0
  %v728 = vadd.f32 %v643, %v727
  %v729 = vpop.f32.mrb[0].mxu0
  %730 = vmatprep.mubr.f32.mxu0 0.0
  %731 = vmatmul.mubr.f32.gmra.mrb[0].mxu0 %v532
  %v732 = vpop.f32.mrb[0].mxu0
  %v733 = vadd.f32 %v648, %v732
  %v734 = vpop.f32.mrb[0].mxu0
  %735 = vmatprep.mubr.f32.mxu0 0.0
  %736 = vmatmul.mubr.f32.gmra.mrb[0].mxu0 %v533
  %v737 = vpop.f32.mrb[0].mxu0
  %v738 = vadd.f32 %v653, %v737
  %v739 = vpop.f32.mrb[0].mxu0
  %740 = vdwg.mxu0
  %v741 = vld [vmem:[#allocation2 + $0x2] sm:$0xff]
  %v742 = vld [vmem:[#allocation2 + $0xa] sm:$0xff]
  %v743 = vld [vmem:[#allocation2 + $0x1a] sm:$0xff]
  %v744 = vld [vmem:[#allocation2 + $0x22] sm:$0xff]
  %s745 = scalar_lea.vmem %s2, 256
  %v746 = vld [vmem:[%s745] sm:$0xff]
  %v747 = vld [vmem:[%s745 + $0x8] sm:$0xff]
  %v748 = vld [vmem:[%s745 + $0x10] sm:$0xff]
  %v749 = vld [vmem:[%s745 + $0x18] sm:$0xff]
  %v750 = vld [vmem:[%s745 + $0x20] sm:$0xff]
  %v751 = vld [vmem:[%s745 + $0x28] sm:$0xff]
  %v752 = vld [vmem:[%s745 + $0x30] sm:$0xff]
  %v753 = vld [vmem:[%s745 + $0x38] sm:$0xff]
  %v754 = vld [vmem:[%s745 + $0x40] sm:$0xff]
  %v755 = vld [vmem:[%s745 + $0x48] sm:$0xff]
  %v756 = vld [vmem:[%s745 + $0x50] sm:$0xff]
  %v757 = vld [vmem:[%s745 + $0x58] sm:$0xff]
  %v758 = vld [vmem:[%s745 + $0x60] sm:$0xff]
  %v759 = vld [vmem:[%s745 + $0x68] sm:$0xff]
  %v760 = vld [vmem:[%s745 + $0x70] sm:$0xff]
  %v761 = vld [vmem:[%s745 + $0x78] sm:$0xff]
  %762 = vmatprep.subr.mxu0 0.0
  %763 = vmatpush1.msra.mxu0 %v746
  %764 = vmatprep.subr.mxu0 0.0
  %765 = vmatpush1.msra.mxu0 %v747
  %766 = vmatprep.subr.mxu0 0.0
  %767 = vmatpush1.msra.mxu0 %v748
  %768 = vmatprep.subr.mxu0 0.0
  %769 = vmatpush1.msra.mxu0 %v749
  %770 = vmatprep.subr.mxu0 0.0
  %771 = vmatpush1.msra.mxu0 %v750
  %772 = vmatprep.subr.mxu0 0.0
  %773 = vmatpush1.msra.mxu0 %v751
  %774 = vmatprep.subr.mxu0 0.0
  %775 = vmatpush1.msra.mxu0 %v752
  %776 = vmatprep.subr.mxu0 0.0
  %777 = vmatpush1.msra.mxu0 %v753
  %778 = vmatprep.subr.mxu0 0.0
  %779 = vmatpush1.msra.mxu0 %v754
  %780 = vmatprep.subr.mxu0 0.0
  %781 = vmatpush1.msra.mxu0 %v755
  %782 = vmatprep.subr.mxu0 0.0
  %783 = vmatpush1.msra.mxu0 %v756
  %784 = vmatprep.subr.mxu0 0.0
  %785 = vmatpush1.msra.mxu0 %v757
  %786 = vmatprep.subr.mxu0 0.0
  %787 = vmatpush1.msra.mxu0 %v758
  %788 = vmatprep.subr.mxu0 0.0
  %789 = vmatpush1.msra.mxu0 %v759
  %790 = vmatprep.subr.mxu0 0.0
  %791 = vmatpush1.msra.mxu0 %v760
  %792 = vmatprep.subr.mxu0 0.0
  %793 = vmatpush1.msra.mxu0 %v761
  %794 = vmatprep.subr.mxu0 0.0
  %795 = vmatpush1.msra.mxu0 0.0
  %796 = vmatprep.subr.mxu0 0.0
  %797 = vmatpush1.msra.mxu0 0.0
  %798 = vmatprep.subr.mxu0 0.0
  %799 = vmatpush1.msra.mxu0 0.0
  %800 = vmatprep.subr.mxu0 0.0
  %801 = vmatpush1.msra.mxu0 0.0
  %802 = vmatprep.subr.mxu0 0.0
  %803 = vmatpush1.msra.mxu0 0.0
  %804 = vmatprep.subr.mxu0 0.0
  %805 = vmatpush1.msra.mxu0 0.0
  %806 = vmatprep.subr.mxu0 0.0
  %807 = vmatpush1.msra.mxu0 0.0
  %808 = vmatprep.subr.mxu0 0.0
  %809 = vmatpush1.msra.mxu0 0.0
  %810 = vmatprep.subr.mxu0 0.0
  %811 = vmatpush1.msra.mxu0 0.0
  %812 = vmatprep.subr.mxu0 0.0
  %813 = vmatpush1.msra.mxu0 0.0
  %814 = vmatprep.subr.mxu0 0.0
  %815 = vmatpush1.msra.mxu0 0.0
  %816 = vmatprep.subr.mxu0 0.0
  %817 = vmatpush1.msra.mxu0 0.0
  %818 = vmatprep.subr.mxu0 0.0
  %819 = vmatpush1.msra.mxu0 0.0
  %820 = vmatprep.subr.mxu0 0.0
  %821 = vmatpush1.msra.mxu0 0.0
  %822 = vmatprep.subr.mxu0 0.0
  %823 = vmatpush1.msra.mxu0 0.0
  %824 = vmatprep.subr.mxu0 0.0
  %825 = vmatpush1.msra.mxu0 0.0
  %826 = vmatprep.mubr.f32.mxu0 0.0
  %827 = vmatmul.mubr.f32.gmra.mrb[0].mxu0 %v741
  %v828 = vpop.f32.mrb[0].mxu0
  %v829 = vadd.f32 0.0, %v828
  %v830 = vpop.f32.mrb[0].mxu0
  %831 = vmatprep.mubr.f32.mxu0 0.0
  %832 = vmatmul.mubr.f32.gmra.mrb[0].mxu0 %v742
  %v833 = vpop.f32.mrb[0].mxu0
  %v834 = vadd.f32 0.0, %v833
  %v835 = vpop.f32.mrb[0].mxu0
  %836 = vmatprep.mubr.f32.mxu0 0.0
  %837 = vmatmul.mubr.f32.gmra.mrb[0].mxu0 %v743
  %v838 = vpop.f32.mrb[0].mxu0
  %v839 = vadd.f32 0.0, %v838
  %v840 = vpop.f32.mrb[0].mxu0
  %841 = vmatprep.mubr.f32.mxu0 0.0
  %842 = vmatmul.mubr.f32.gmra.mrb[0].mxu0 %v744
  %v843 = vpop.f32.mrb[0].mxu0
  %v844 = vadd.f32 0.0, %v843
  %v845 = vpop.f32.mrb[0].mxu0
  %846 = vdwg.mxu0
  %v847 = vadd.f32 %v723, %v829
  %v848 = vadd.f32 %v728, %v834
  %v849 = vadd.f32 %v733, %v839
  %v850 = vadd.f32 %v738, %v844
  %v851 = vadd.f32 %v847, %v848
  %v852 = vadd.f32 %v851, %v849
  %v853 = vadd.f32 %v852, %v850
  %v854 = vrot.slane %v853, 4
  %v855 = vadd.f32 %v853, %v854
  %v856 = vrot.slane %v855, 2
  %v857 = vadd.f32 %v855, %v856
  %v858 = vrot.slane %v857, 1
  %v859 = vadd.f32 %v857, %v858
  %v860 = vmul.f32 %v847, %v847
  %v861 = vmul.f32 %v848, %v848
  %v862 = vmul.f32 %v849, %v849
  %v863 = vmul.f32 %v850, %v850
  %v864 = vadd.f32 %v860, %v861
  %v865 = vadd.f32 %v864, %v862
  %v866 = vadd.f32 %v865, %v863
  %v867 = vrot.slane %v866, 4
  %v868 = vadd.f32 %v866, %v867
  %v869 = vrot.slane %v868, 2
  %v870 = vadd.f32 %v868, %v869
  %v871 = vrot.slane %v870, 1
  %v872 = vadd.f32 %v870, %v871
  %v873 = vsel %vm400, %v859, %v872
  %874 = vmatprep.subr.mxu0 0.0
  %875 = vmatpush1.msra.mxu0 %v29
  %876 = vmatprep.subr.mxu0 0.0
  %877 = vmatpush1.msra.mxu0 %v30
  %878 = vmatprep.subr.mxu0 0.0
  %879 = vmatpush1.msra.mxu0 %v31
  %880 = vmatprep.subr.mxu0 0.0
  %881 = vmatpush1.msra.mxu0 %v32
  %882 = vmatprep.subr.mxu0 0.0
  %883 = vmatpush1.msra.mxu0 %v33
  %884 = vmatprep.subr.mxu0 0.0
  %885 = vmatpush1.msra.mxu0 %v34
  %886 = vmatprep.subr.mxu0 0.0
  %887 = vmatpush1.msra.mxu0 %v35
  %888 = vmatprep.subr.mxu0 0.0
  %889 = vmatpush1.msra.mxu0 %v36
  %890 = vmatprep.subr.mxu0 0.0
  %891 = vmatpush1.msra.mxu0 %v37
  %892 = vmatprep.subr.mxu0 0.0
  %893 = vmatpush1.msra.mxu0 %v38
  %894 = vmatprep.subr.mxu0 0.0
  %895 = vmatpush1.msra.mxu0 %v39
  %896 = vmatprep.subr.mxu0 0.0
  %897 = vmatpush1.msra.mxu0 %v40
  %898 = vmatprep.subr.mxu0 0.0
  %899 = vmatpush1.msra.mxu0 %v41
  %900 = vmatprep.subr.mxu0 0.0
  %901 = vmatpush1.msra.mxu0 %v42
  %902 = vmatprep.subr.mxu0 0.0
  %903 = vmatpush1.msra.mxu0 %v43
  %904 = vmatprep.subr.mxu0 0.0
  %905 = vmatpush1.msra.mxu0 %v44
  %906 = vmatprep.subr.mxu0 0.0
  %907 = vmatpush1.msra.mxu0 0.0
  %908 = vmatprep.subr.mxu0 0.0
  %909 = vmatpush1.msra.mxu0 0.0
  %910 = vmatprep.subr.mxu0 0.0
  %911 = vmatpush1.msra.mxu0 0.0
  %912 = vmatprep.subr.mxu0 0.0
  %913 = vmatpush1.msra.mxu0 0.0
  %914 = vmatprep.subr.mxu0 0.0
  %915 = vmatpush1.msra.mxu0 0.0
  %916 = vmatprep.subr.mxu0 0.0
  %917 = vmatpush1.msra.mxu0 0.0
  %918 = vmatprep.subr.mxu0 0.0
  %919 = vmatpush1.msra.mxu0 0.0
  %920 = vmatprep.subr.mxu0 0.0
  %921 = vmatpush1.msra.mxu0 0.0
  %922 = vmatprep.subr.mxu0 0.0
  %923 = vmatpush1.msra.mxu0 0.0
  %924 = vmatprep.subr.mxu0 0.0
  %925 = vmatpush1.msra.mxu0 0.0
  %926 = vmatprep.subr.mxu0 0.0
  %927 = vmatpush1.msra.mxu0 0.0
  %928 = vmatprep.subr.mxu0 0.0
  %929 = vmatpush1.msra.mxu0 0.0
  %930 = vmatprep.subr.mxu0 0.0
  %931 = vmatpush1.msra.mxu0 0.0
  %932 = vmatprep.subr.mxu0 0.0
  %933 = vmatpush1.msra.mxu0 0.0
  %934 = vmatprep.subr.mxu0 0.0
  %935 = vmatpush1.msra.mxu0 0.0
  %936 = vmatprep.subr.mxu0 0.0
  %937 = vmatpush1.msra.mxu0 0.0
  %938 = vmatprep.mubr.f32.mxu0 0.0
  %939 = vmatmul.mubr.f32.gmra.mrb[0].mxu0 %v873
  %v940 = vpop.f32.mrb[0].mxu0
  %v941 = vadd.f32 0.0, %v940
  %v942 = vpop.f32.mrb[0].mxu0
  %943 = vdwg.mxu0
  %v944 = vmul.f32 %v941, 0.001953125
  %v945 = vmul.f32 %v944, %v944
  %v947 = vrot.slane %v945, 7
  %v949 = vsub.f32 %v944, %v947
  %v950 = vld [vmem:[%s5] sm:$0x1]
  %v951 = vadd.f32 %v949, 1e-05
  %v952 = vrsqrt.pop %v951
  %v955 = vunpack.c.l.s4 1966171168
  %v956 = vunpack.c.0.s8 %v955
  %v957 = vlaneseq
  %v958 = vshrl.u32 %v957, 7
  %v959 = vsub.s32 %v956, %v958
  %v960 = vrot.slane %v952, %v959
  %v961 = vcombine.high %v960, %v960
  %v963 = vunpack.c.l.s4 1966171168
  %v964 = vunpack.c.0.s8 %v963
  %v965 = vlaneseq
  %v966 = vshrl.u32 %v965, 7
  %v967 = vsub.s32 %v964, %v966
  %v968 = vrot.slane %v961, %v967
  %v970 = vmul.f32 %v950, %v968
  %v971 = vld [vmem:[%s6] sm:$0x1]
  %v972 = vmul.f32 %v944, %v970
  %v973 = vsub.f32 %v971, %v972
  %v975 = vlaneseq
  %v976 = vshrl.u32 %v975, 7
  %v977 = vsub.s32 0, %v976
  %v978 = vrot.slane %v970, %v977
  %v980 = vmul.f32 %v847, %v978
  %v981 = vmul.f32 %v848, %v978
  %v982 = vmul.f32 %v849, %v978
  %v983 = vmul.f32 %v850, %v978
  %v985 = vlaneseq
  %v986 = vshrl.u32 %v985, 7
  %v987 = vsub.s32 0, %v986
  %v988 = vrot.slane %v973, %v987
  %v990 = vadd.f32 %v980, %v988
  %v991 = vadd.f32 %v981, %v988
  %v992 = vadd.f32 %v982, %v988
  %v993 = vadd.f32 %v983, %v988
  %v994 = vadd.f32 %v990, %v45
  %v995 = vadd.f32 %v991, %v46
  %v996 = vadd.f32 %v992, %v47
  %v997 = vadd.f32 %v993, %v48
  %v998 = vmax.f32 %v994, 0.0
  %v999 = vmax.f32 %v995, 0.0
  %v1000 = vmax.f32 %v996, 0.0
  %v1001 = vmax.f32 %v997, 0.0
  %1002 = vst [vmem:[%s8] sm:$0xff] %v998
  %1003 = vst [vmem:[%s8 + $0x8] sm:$0xff] %v999
  %1004 = vst [vmem:[%s8 + $0x10] sm:$0xff] %v1000
  %1005 = vst [vmem:[%s8 + $0x18] sm:$0xff] %v1001
  // Predicated region
  $region34: #{small_block_forward.1} parent=0 // pred_check
    _
  $region35: #{small_block_forward.1} parent=0 // pred_check_branch
    %1007 = sbr.rel (0) target = $region37
  $region36: #{small_block_forward.1} parent=0 // pred_region
    _
  $region37: #{small_block_forward.1} parent=0 // pred_fallthru
    _
  // Predicated region
  $region38: #{small_block_forward.1} parent=0 // pred_check
    _
  $region39: #{small_block_forward.1} parent=0 // pred_check_branch
    %1009 = sbr.rel (0) target = $region41
  $region40: #{small_block_forward.1} parent=0 // pred_region
    _
  $region41: #{small_block_forward.1} parent=0 // pred_fallthru
    _

</llo_original>
